<compile_context>
chip_gen: v5e
topology: v5e:2x2
jax: 0.10.0
libtpu: 0.0.40
codegen_flags: <defaults>
</compile_context>

<pallas_src>
import numpy as np
import jax
import jax.numpy as jnp
from jax import lax
from jax.experimental import pallas as pl
from jax.experimental.pallas import tpu as pltpu

_A_CUBIC = -0.75  # PyTorch bicubic "a" coefficient


def _cubic_kernel(x: float) -> float:
    ax = abs(float(x))
    a = _A_CUBIC
    if ax <= 1.0:
        return (a + 2.0) * ax ** 3 - (a + 3.0) * ax ** 2 + 1.0
    if ax < 2.0:
        return a * ax ** 3 - 5.0 * a * ax ** 2 + 8.0 * a * ax - 4.0 * a
    return 0.0


def _bicubic_band(in_size: int, out_size: int):
    """Banded form of 1-D bicubic interpolation (align_corners=False), matching
    torch.nn.functional.interpolate:  out[i] = sum_{k<4} w[i, k] * x[base[i] + k]."""
    base = np.zeros((out_size,), np.int64)
    w = np.zeros((out_size, 4), np.float64)
    scale = in_size / out_size
    hi = max(in_size - 4, 0)
    for i in range(out_size):
        real = scale * (i + 0.5) - 0.5
        idx = int(np.floor(real))
        t = real - idx
        b0 = min(max(idx - 1, 0), hi)
        base[i] = b0
        for k in range(-1, 3):
            j = min(max(idx + k, 0), in_size - 1)
            w[i, j - b0] += _cubic_kernel(t - k)
    return base, w.astype(np.float32)


def _round_up(x: int, m: int) -> int:
    return (x + m - 1) // m * m


def _specaugment_pallas(params, means, x, src, wts, *, tT,
                        num_feature_masks, num_frame_masks):
    """params: (B * n_cols,) int32 [apply, warp, f_s, f_e, ..., t_s, t_e, ...] per example
    means : (B,) f32 per-example mean of the original (unpadded) features
    x     : (B, T_pad, F_pad) f32 zero-padded features
    src   : (B, T_pad, 1) int32 band base rows,  wts: (B, T_pad, 4) f32 band tap weights."""
    B, T_pad, F_pad = x.shape
    n_tb = T_pad // tT
    n_cols = 2 + 2 * num_feature_masks + 2 * num_frame_masks

    def kernel(params_ref, means_ref, xp_ref, xc_ref, xn_ref, src_ref, wts_ref, o_ref):
        b = pl.program_id(0)
        t = pl.program_id(1)
        pbase = b * n_cols
        apply_flag = params_ref[pbase + 0] > 0
        warp_flag = params_ref[pbase + 1] > 0
        row0 = t * tT

        def store_augmented(rows):                       # rows: (tT, F_pad) f32
            mean = means_ref[b]                          # host-precomputed (unpadded) mean
            # 1-D masks only (no (T,F) iotas), combined once.
            f_io = lax.broadcasted_iota(jnp.int32, (1, F_pad), 1)
            t_io = lax.broadcasted_iota(jnp.int32, (tT, 1), 0) + row0
            col = pbase + 2
            f_mask = jnp.zeros((1, F_pad), jnp.bool_)
            for _ in range(num_feature_masks):
                s = params_ref[col]
                e = params_ref[col + 1]
                col += 2
                f_mask = f_mask | ((f_io >= s) & (f_io < e))
            t_mask = jnp.zeros((tT, 1), jnp.bool_)
            for _ in range(num_frame_masks):
                s = params_ref[col]
                e = params_ref[col + 1]
                col += 2
                t_mask = t_mask | ((t_io >= s) & (t_io < e))
            mask = f_mask | t_mask                       # broadcasts to (tT, F_pad)
            o_ref[0] = jnp.where(mask, mean, rows).astype(o_ref.dtype)

        # --- not applied: plain block copy, no matmul / mask work ---
        @pl.when(jnp.logical_not(apply_flag))
        def _():
            o_ref[0] = xc_ref[0].astype(o_ref.dtype)

        # --- applied with time warp: banded warp matrix over the prev/cur/next window ---
        @pl.when(jnp.logical_and(apply_flag, warp_flag))
        def _():
            base = src_ref[0]                            # (tT, 1) int32 global source rows
            w4 = wts_ref[0]                              # (tT, 4) f32 tap weights
            # Window covers global rows [(t-1)*tT, (t+2)*tT).  At the grid edges the
            # prev/next blocks are clamped duplicates whose weights are provably zero
            # (band rows always lie inside [0, T)).
            j_idx = lax.broadcasted_iota(jnp.int32, (tT, 3 * tT), 1) + (row0 - tT)
            # Single fused bf16 expression (review): keeps each (8,128) tile in vregs.
            # TODO(synk): keep the warp in f32 if bit-closeness to torch bicubic matters.
            wm = (jnp.where(j_idx == base, w4[:, 0:1], 0.0)
                  + jnp.where(j_idx == base + 1, w4[:, 1:2], 0.0)
                  + jnp.where(j_idx == base + 2, w4[:, 2:3], 0.0)
                  + jnp.where(j_idx == base + 3, w4[:, 3:4], 0.0)).astype(jnp.bfloat16)
            xw = jnp.concatenate([xp_ref[0], xc_ref[0], xn_ref[0]],
                                 axis=0).astype(jnp.bfloat16)          # (3*tT, F_pad)
            warped = jnp.dot(wm, xw, preferred_element_type=jnp.float32)
            store_augmented(warped)

        # --- applied, identity warp: skip the matmul, keep features exact ---
        @pl.when(jnp.logical_and(apply_flag, jnp.logical_not(warp_flag)))
        def _():
            store_augmented(xc_ref[0])

    grid_spec = pltpu.PrefetchScalarGridSpec(
        num_scalar_prefetch=1,
        grid=(B, n_tb),
        in_specs=[
            pl.BlockSpec(memory_space=pltpu.MemorySpace.SMEM),              # means (B,)
            pl.BlockSpec((1, tT, F_pad), lambda b, t, p: (b, jnp.maximum(t - 1, 0), 0)),
            pl.BlockSpec((1, tT, F_pad), lambda b, t, p: (b, t, 0)),
            pl.BlockSpec((1, tT, F_pad),
                         lambda b, t, p: (b, jnp.minimum(t + 1, n_tb - 1), 0)),
            pl.BlockSpec((1, tT, 1), lambda b, t, p: (b, t, 0)),            # band base rows
            pl.BlockSpec((1, tT, 4), lambda b, t, p: (b, t, 0)),            # band weights
        ],
        out_specs=pl.BlockSpec((1, tT, F_pad), lambda b, t, p: (b, t, 0)),
    )
    cost = pl.CostEstimate(
        flops=int(2 * B * n_tb * tT * (3 * tT) * F_pad),
        transcendentals=0,
        bytes_accessed=int(4 * B * T_pad * F_pad * 4 + B * T_pad * 20 + B * 4),
    )
    return pl.pallas_call(
        kernel,
        out_shape=jax.ShapeDtypeStruct((B, T_pad, F_pad), x.dtype),
        grid_spec=grid_spec,
        compiler_params=pltpu.CompilerParams(
            dimension_semantics=("parallel", "parallel"),
        ),
        cost_estimate=cost,
    )(params, means, x, x, x, src, wts)


class SpecAugmentPallas:
    """Pallas TPU port of lhotse SpecAugment.forward.

    Per-example randomness (apply flag, warp center/target, mask positions) is drawn on
    the host with a deterministic numpy Generator, mirroring the distributions of the
    PyTorch module; all array compute (banded warp, masking, select) runs in the Pallas
    kernel; the reference mean is precomputed per example on the host.
    """

    def __init__(self, time_warp_factor=80, num_feature_masks=1, features_mask_size=13,
                 num_frame_masks=1, frames_mask_size=70, p=0.5, seed=0):
        assert 0 <= p <= 1
        assert num_feature_masks >= 0 and num_frame_masks >= 0
        assert features_mask_size > 0 and frames_mask_size > 0
        self.time_warp_factor = time_warp_factor
        self.num_feature_masks = num_feature_masks
        self.features_mask_size = features_mask_size
        self.num_frame_masks = num_frame_masks
        self.frames_mask_size = frames_mask_size
        self.p = p
        self.rng = np.random.default_rng(seed)

    def _make_example_params(self, T, F, T_pad):
        n_cols = 2 + 2 * self.num_feature_masks + 2 * self.num_frame_masks
        scalars = np.zeros((n_cols,), dtype=np.int32)
        # Identity band (exactly reproduces x when used).
        idx = np.arange(T_pad)
        src = np.clip(idx - 1, 0, max(T_pad - 4, 0)).astype(np.int32)
        wts = np.zeros((T_pad, 4), dtype=np.float32)
        wts[idx, idx - src] = 1.0

        if self.rng.random() > self.p:          # probability-p gate (apply flag stays 0)
            return scalars, src, wts
        scalars[0] = 1

        # time warp -> banded bicubic interpolation (warp flag marks non-identity warp)
        if self.time_warp_factor is not None and self.time_warp_factor >= 1:
            f = self.time_warp_factor
            if T - f > f + 1:
                center = int(self.rng.integers(f + 1, T - f))
                warped = int(self.rng.integers(center - f, center + f + 1))
                if warped != center:
                    scalars[1] = 1
                    b1, w1 = _bicubic_band(center, warped)
                    b2, w2 = _bicubic_band(T - center, T - warped)
                    src[:warped] = b1
                    wts[:warped] = w1
                    src[warped:T] = b2 + center
                    wts[warped:T] = w2

        col = 2
        # torchaudio.functional.mask_along_axis semantics
        for _ in range(self.num_feature_masks):
            value = self.rng.random() * self.features_mask_size
            min_value = self.rng.random() * (F - value)
            scalars[col] = int(min_value)
            scalars[col + 1] = int(min_value) + int(value)
            col += 2
        for _ in range(self.num_frame_masks):
            value = self.rng.random() * self.frames_mask_size
            min_value = self.rng.random() * (T - value)
            scalars[col] = int(min_value)
            scalars[col + 1] = int(min_value) + int(value)
            col += 2
        return scalars, src, wts

    def __call__(self, features):
        feats = np.asarray(features, dtype=np.float32)
        squeeze = feats.ndim == 2
        if squeeze:
            feats = feats[None]
        B, T, F = feats.shape

        # Lane-dense feature padding; time tile sized so the prev/cur/next window always
        # covers the warp band (|src_row - out_row| <= factor + 4).
        F_pad = _round_up(F, 128)
        f = self.time_warp_factor
        warp_possible = f is not None and f >= 1 and (T - f > f + 1)
        tT = _round_up(min(max(T, 8), 128), 8)
        if warp_possible:
            tT = max(tT, _round_up(f + 8, 8))
        T_pad = _round_up(T, tT)
        n_cols = 2 + 2 * self.num_feature_masks + 2 * self.num_frame_masks

        params = np.zeros((B, n_cols), dtype=np.int32)
        src = np.zeros((B, T_pad, 1), dtype=np.int32)
        wts = np.zeros((B, T_pad, 4), dtype=np.float32)
        for bi in range(B):
            s, sb, wb = self._make_example_params(T, F, T_pad)
            params[bi] = s
            src[bi, :, 0] = sb
            wts[bi] = wb

        # Host-side early exit: nothing to do for the whole batch (review).
        if not params[:, 0].any():
            out = jnp.asarray(feats)
            return out[0] if squeeze else out

        # Per-example mean over the UNPADDED (T, F) region, exactly as the reference
        # takes it before time_warp / masking.
        means = feats.reshape(B, -1).mean(axis=1).astype(np.float32)

        # Defensive: band rows must stay inside each tile's prev/cur/next window
        # (guaranteed by tT >= factor + 8).
        band_lo = (np.arange(T_pad) // tT - 1) * tT
        band_hi = (np.arange(T_pad) // tT + 2) * tT
        assert np.all((src[:, :, 0] >= band_lo) & (src[:, :, 0] + 3 < band_hi)), \
            "time-warp band exceeds the prev/cur/next window; increase tT"

        x_pad = np.zeros((B, T_pad, F_pad), dtype=np.float32)
        x_pad[:, :T, :F] = feats

        out = _specaugment_pallas(
            jnp.asarray(params.reshape(-1)), jnp.asarray(means), jnp.asarray(x_pad),
            jnp.asarray(src), jnp.asarray(wts),
            tT=tT,
            num_feature_masks=self.num_feature_masks,
            num_frame_masks=self.num_frame_masks,
        )
        out = out[:, :T, :F]
        return out[0] if squeeze else out


if __name__ == "__main__":
    key = jax.random.PRNGKey(0)
    B, T, F = 2, 32, 128  # small shapes: batch=2, 32 frames, 128 feature bins
    x = jax.random.normal(key, (B, T, F), dtype=jnp.float32)

    aug = SpecAugmentPallas(
        time_warp_factor=5,        # must satisfy T - factor > factor + 1 for warping
        num_feature_masks=1, features_mask_size=13,
        num_frame_masks=1, frames_mask_size=8,
        p=0.5, seed=0,
    )
    y = aug(x)
    jax.block_until_ready(y)
    assert y.shape == (B, T, F) and bool(jnp.all(jnp.isfinite(y)))

    # Exercise the always-apply path (warp + masks) as well.
    aug2 = SpecAugmentPallas(
        time_warp_factor=5, num_feature_masks=1, features_mask_size=13,
        num_frame_masks=1, frames_mask_size=8, p=1.0, seed=1,
    )
    y2 = aug2(x)
    jax.block_until_ready(y2)
    assert y2.shape == (B, T, F) and bool(jnp.all(jnp.isfinite(y2)))

    print("KERNEL_OK")
</pallas_src>

<mosaic_0001>
module attributes {stable_mosaic.version = 11 : i64} {
  func.func @kernel(%arg0: i32, %arg1: i32, %arg2: memref<12xi32, #tpu.memory_space<smem>>, %arg3: memref<2xf32, #tpu.memory_space<smem>>, %arg4: memref<1x32x128xf32, #tpu.memory_space<vmem>>, %arg5: memref<1x32x128xf32, #tpu.memory_space<vmem>>, %arg6: memref<1x32x128xf32, #tpu.memory_space<vmem>>, %arg7: memref<1x32x1xi32, #tpu.memory_space<vmem>>, %arg8: memref<1x32x4xf32, #tpu.memory_space<vmem>>, %arg9: memref<1x32x128xf32, #tpu.memory_space<vmem>>) attributes {dimension_semantics = [#tpu.dimension_semantics<parallel>, #tpu.dimension_semantics<parallel>], iteration_bounds = array<i64: 2, 1>, scalar_prefetch = 1 : i64, scratch_operands = 0 : i64, tpu.core_type = #tpu.core_type<tc>, window_params = [{transform_indices = @transform_0, window_bounds = array<i64: 2>}, {transform_indices = @transform_1, window_bounds = array<i64: 1, 32, 128>}, {transform_indices = @transform_2, window_bounds = array<i64: 1, 32, 128>}, {transform_indices = @transform_3, window_bounds = array<i64: 1, 32, 128>}, {transform_indices = @transform_4, window_bounds = array<i64: 1, 32, 1>}, {transform_indices = @transform_5, window_bounds = array<i64: 1, 32, 4>}, {transform_indices = @transform_6, window_bounds = array<i64: 1, 32, 128>}]} {
    %c6_i32 = arith.constant 6 : i32
    %0 = arith.muli %arg0, %c6_i32 : i32
    %c0_i32 = arith.constant 0 : i32
    %1 = arith.addi %0, %c0_i32 : i32
    %2 = arith.index_cast %1 : i32 to index
    %3 = memref.load %arg2[%2] : memref<12xi32, #tpu.memory_space<smem>>
    %c0_i32_0 = arith.constant 0 : i32
    %4 = arith.cmpi sgt, %3, %c0_i32_0 : i32
    %c1_i32 = arith.constant 1 : i32
    %5 = arith.addi %0, %c1_i32 : i32
    %6 = arith.index_cast %5 : i32 to index
    %7 = memref.load %arg2[%6] : memref<12xi32, #tpu.memory_space<smem>>
    %c0_i32_1 = arith.constant 0 : i32
    %8 = arith.cmpi sgt, %7, %c0_i32_1 : i32
    %c32_i32 = arith.constant 32 : i32
    %9 = arith.muli %arg1, %c32_i32 : i32
    %true = arith.constant true
    %10 = arith.xori %4, %true : i1
    %11 = arith.extui %10 : i1 to i32
    %c0_i32_2 = arith.constant 0 : i32
    %12 = arith.cmpi ne, %11, %c0_i32_2 : i32
    scf.if %12 {
      %c0 = arith.constant 0 : index
      %c0_6 = arith.constant 0 : index
      %c0_7 = arith.constant 0 : index
      %20 = vector.load %arg5[%c0, %c0_6, %c0_7] : memref<1x32x128xf32, #tpu.memory_space<vmem>>, vector<1x32x128xf32>
      %21 = vector.shape_cast %20 : vector<1x32x128xf32> to vector<32x128xf32>
      %c0_8 = arith.constant 0 : index
      %c0_9 = arith.constant 0 : index
      %c0_10 = arith.constant 0 : index
      %22 = vector.load %arg9[%c0_8, %c0_9, %c0_10] : memref<1x32x128xf32, #tpu.memory_space<vmem>>, vector<1x32x128xf32>
      %23 = vector.shape_cast %22 : vector<1x32x128xf32> to vector<32x128xf32>
      %24 = vector.shape_cast %21 : vector<32x128xf32> to vector<1x32x128xf32>
      tpu.vector_store %arg9[%c0_8, %c0_9, %c0_10], %24 {strides = array<i32>} : memref<1x32x128xf32, #tpu.memory_space<vmem>>, vector<1x32x128xf32>,
    } else {
    }
    %13 = arith.andi %4, %8 : i1
    %14 = arith.extui %13 : i1 to i32
    %c0_i32_3 = arith.constant 0 : i32
    %15 = arith.cmpi ne, %14, %c0_i32_3 : i32
    scf.if %15 {
      %c0 = arith.constant 0 : index
      %c0_6 = arith.constant 0 : index
      %c0_7 = arith.constant 0 : index
      %20 = vector.load %arg7[%c0, %c0_6, %c0_7] : memref<1x32x1xi32, #tpu.memory_space<vmem>>, vector<1x32x1xi32>
      %21 = vector.shape_cast %20 : vector<1x32x1xi32> to vector<32x1xi32>
      %c0_8 = arith.constant 0 : index
      %c0_9 = arith.constant 0 : index
      %c0_10 = arith.constant 0 : index
      %22 = vector.load %arg8[%c0_8, %c0_9, %c0_10] : memref<1x32x4xf32, #tpu.memory_space<vmem>>, vector<1x32x4xf32>
      %23 = vector.shape_cast %22 : vector<1x32x4xf32> to vector<32x4xf32>
      %24 = tpu.iota {dimensions = array<i32: 1>} : vector<32x96xi32>
      %c32_i32_11 = arith.constant 32 : i32
      %25 = arith.subi %9, %c32_i32_11 : i32
      %26 = vector.broadcast %25 : i32 to vector<32x96xi32>
      %27 = arith.addi %24, %26 : vector<32x96xi32>
      %28 = vector.broadcast %21 : vector<32x1xi32> to vector<32x96xi32>
      %29 = arith.cmpi eq, %27, %28 : vector<32x96xi32>
      %30 = vector.extract_strided_slice %23 {offsets = [0, 0], sizes = [32, 1], strides = [1, 1]} : vector<32x4xf32> to vector<32x1xf32>
      %cst = arith.constant 0.000000e+00 : f32
      %31 = vector.shape_cast %30 : vector<32x1xf32> to vector<32x1xf32>
      %32 = vector.broadcast %31 : vector<32x1xf32> to vector<32x96xf32>
      %33 = vector.broadcast %cst : f32 to vector<32x96xf32>
      %34 = arith.select %29, %32, %33 : vector<32x96xi1>, vector<32x96xf32>
      %c1_i32_12 = arith.constant 1 : i32
      %35 = vector.broadcast %c1_i32_12 : i32 to vector<32x1xi32>
      %36 = arith.addi %21, %35 : vector<32x1xi32>
      %37 = vector.broadcast %36 : vector<32x1xi32> to vector<32x96xi32>
      %38 = arith.cmpi eq, %27, %37 : vector<32x96xi32>
      %39 = vector.extract_strided_slice %23 {offsets = [0, 1], sizes = [32, 1], strides = [1, 1]} : vector<32x4xf32> to vector<32x1xf32>
      %cst_13 = arith.constant 0.000000e+00 : f32
      %40 = vector.shape_cast %39 : vector<32x1xf32> to vector<32x1xf32>
      %41 = vector.broadcast %40 : vector<32x1xf32> to vector<32x96xf32>
      %42 = vector.broadcast %cst_13 : f32 to vector<32x96xf32>
      %43 = arith.select %38, %41, %42 : vector<32x96xi1>, vector<32x96xf32>
      %44 = arith.addf %34, %43 : vector<32x96xf32>
      %c2_i32 = arith.constant 2 : i32
      %45 = vector.broadcast %c2_i32 : i32 to vector<32x1xi32>
      %46 = arith.addi %21, %45 : vector<32x1xi32>
      %47 = vector.broadcast %46 : vector<32x1xi32> to vector<32x96xi32>
      %48 = arith.cmpi eq, %27, %47 : vector<32x96xi32>
      %49 = vector.extract_strided_slice %23 {offsets = [0, 2], sizes = [32, 1], strides = [1, 1]} : vector<32x4xf32> to vector<32x1xf32>
      %cst_14 = arith.constant 0.000000e+00 : f32
      %50 = vector.shape_cast %49 : vector<32x1xf32> to vector<32x1xf32>
      %51 = vector.broadcast %50 : vector<32x1xf32> to vector<32x96xf32>
      %52 = vector.broadcast %cst_14 : f32 to vector<32x96xf32>
      %53 = arith.select %48, %51, %52 : vector<32x96xi1>, vector<32x96xf32>
      %54 = arith.addf %44, %53 : vector<32x96xf32>
      %c3_i32 = arith.constant 3 : i32
      %55 = vector.broadcast %c3_i32 : i32 to vector<32x1xi32>
      %56 = arith.addi %21, %55 : vector<32x1xi32>
      %57 = vector.broadcast %56 : vector<32x1xi32> to vector<32x96xi32>
      %58 = arith.cmpi eq, %27, %57 : vector<32x96xi32>
      %59 = vector.extract_strided_slice %23 {offsets = [0, 3], sizes = [32, 1], strides = [1, 1]} : vector<32x4xf32> to vector<32x1xf32>
      %cst_15 = arith.constant 0.000000e+00 : f32
      %60 = vector.shape_cast %59 : vector<32x1xf32> to vector<32x1xf32>
      %61 = vector.broadcast %60 : vector<32x1xf32> to vector<32x96xf32>
      %62 = vector.broadcast %cst_15 : f32 to vector<32x96xf32>
      %63 = arith.select %58, %61, %62 : vector<32x96xi1>, vector<32x96xf32>
      %64 = arith.addf %54, %63 : vector<32x96xf32>
      %65 = arith.truncf %64 : vector<32x96xf32> to vector<32x96xbf16>
      %c0_16 = arith.constant 0 : index
      %c0_17 = arith.constant 0 : index
      %c0_18 = arith.constant 0 : index
      %66 = vector.load %arg4[%c0_16, %c0_17, %c0_18] : memref<1x32x128xf32, #tpu.memory_space<vmem>>, vector<1x32x128xf32>
      %67 = vector.shape_cast %66 : vector<1x32x128xf32> to vector<32x128xf32>
      %c0_19 = arith.constant 0 : index
      %c0_20 = arith.constant 0 : index
      %c0_21 = arith.constant 0 : index
      %68 = vector.load %arg5[%c0_19, %c0_20, %c0_21] : memref<1x32x128xf32, #tpu.memory_space<vmem>>, vector<1x32x128xf32>
      %69 = vector.shape_cast %68 : vector<1x32x128xf32> to vector<32x128xf32>
      %c0_22 = arith.constant 0 : index
      %c0_23 = arith.constant 0 : index
      %c0_24 = arith.constant 0 : index
      %70 = vector.load %arg6[%c0_22, %c0_23, %c0_24] : memref<1x32x128xf32, #tpu.memory_space<vmem>>, vector<1x32x128xf32>
      %71 = vector.shape_cast %70 : vector<1x32x128xf32> to vector<32x128xf32>
      %72 = tpu.concatenate %67, %69, %71 in 0 : vector<32x128xf32>, vector<32x128xf32>, vector<32x128xf32> -> vector<96x128xf32>
      %73 = arith.truncf %72 : vector<96x128xf32> to vector<96x128xbf16>
      %cst_25 = arith.constant dense<0.000000e+00> : vector<32x128xf32>
      %74 = tpu.matmul %65, %73, %cst_25 {dimension_numbers = #tpu.dot_dimension_numbers<[1], [0], [0], [1], [0, 0, 1, 1], [], []>} : vector<32x96xbf16>, vector<96x128xbf16>, vector<32x128xf32> -> vector<32x128xf32>
      %75 = arith.index_cast %arg0 : i32 to index
      %76 = memref.load %arg3[%75] : memref<2xf32, #tpu.memory_space<smem>>
      %77 = tpu.iota {dimensions = array<i32: 1>} : vector<1x128xi32>
      %78 = tpu.iota {dimensions = array<i32: 0>} : vector<32x1xi32>
      %79 = vector.broadcast %9 : i32 to vector<32x1xi32>
      %80 = arith.addi %78, %79 : vector<32x1xi32>
      %c2_i32_26 = arith.constant 2 : i32
      %81 = arith.addi %0, %c2_i32_26 : i32
      %false = arith.constant false
      %82 = vector.broadcast %false : i1 to vector<1x128xi1>
      %83 = arith.index_cast %81 : i32 to index
      %84 = memref.load %arg2[%83] : memref<12xi32, #tpu.memory_space<smem>>
      %c1_i32_27 = arith.constant 1 : i32
      %85 = arith.addi %81, %c1_i32_27 : i32
      %86 = arith.index_cast %85 : i32 to index
      %87 = memref.load %arg2[%86] : memref<12xi32, #tpu.memory_space<smem>>
      %c2_i32_28 = arith.constant 2 : i32
      %88 = arith.addi %81, %c2_i32_28 : i32
      %89 = vector.broadcast %84 : i32 to vector<1x128xi32>
      %90 = arith.cmpi sge, %77, %89 : vector<1x128xi32>
      %91 = vector.broadcast %87 : i32 to vector<1x128xi32>
      %92 = arith.cmpi slt, %77, %91 : vector<1x128xi32>
      %93 = arith.andi %90, %92 : vector<1x128xi1>
      %94 = arith.ori %82, %93 : vector<1x128xi1>
      %false_29 = arith.constant false
      %95 = vector.broadcast %false_29 : i1 to vector<32x1xi1>
      %96 = arith.index_cast %88 : i32 to index
      %97 = memref.load %arg2[%96] : memref<12xi32, #tpu.memory_space<smem>>
      %c1_i32_30 = arith.constant 1 : i32
      %98 = arith.addi %88, %c1_i32_30 : i32
      %99 = arith.index_cast %98 : i32 to index
      %100 = memref.load %arg2[%99] : memref<12xi32, #tpu.memory_space<smem>>
      %101 = vector.broadcast %97 : i32 to vector<32x1xi32>
      %102 = arith.cmpi sge, %80, %101 : vector<32x1xi32>
      %103 = vector.broadcast %100 : i32 to vector<32x1xi32>
      %104 = arith.cmpi slt, %80, %103 : vector<32x1xi32>
      %105 = arith.andi %102, %104 : vector<32x1xi1>
      %106 = arith.ori %95, %105 : vector<32x1xi1>
      %107 = vector.broadcast %94 : vector<1x128xi1> to vector<32x128xi1>
      %108 = vector.broadcast %106 : vector<32x1xi1> to vector<32x128xi1>
      %109 = arith.ori %107, %108 : vector<32x128xi1>
      %110 = vector.broadcast %76 : f32 to vector<32x128xf32>
      %111 = arith.select %109, %110, %74 : vector<32x128xi1>, vector<32x128xf32>
      %c0_31 = arith.constant 0 : index
      %c0_32 = arith.constant 0 : index
      %c0_33 = arith.constant 0 : index
      %112 = vector.load %arg9[%c0_31, %c0_32, %c0_33] : memref<1x32x128xf32, #tpu.memory_space<vmem>>, vector<1x32x128xf32>
      %113 = vector.shape_cast %112 : vector<1x32x128xf32> to vector<32x128xf32>
      %114 = vector.shape_cast %111 : vector<32x128xf32> to vector<1x32x128xf32>
      tpu.vector_store %arg9[%c0_31, %c0_32, %c0_33], %114 {strides = array<i32>} : memref<1x32x128xf32, #tpu.memory_space<vmem>>, vector<1x32x128xf32>,
    } else {
    }
    %true_4 = arith.constant true
    %16 = arith.xori %8, %true_4 : i1
    %17 = arith.andi %4, %16 : i1
    %18 = arith.extui %17 : i1 to i32
    %c0_i32_5 = arith.constant 0 : i32
    %19 = arith.cmpi ne, %18, %c0_i32_5 : i32
    scf.if %19 {
      %c0 = arith.constant 0 : index
      %c0_6 = arith.constant 0 : index
      %c0_7 = arith.constant 0 : index
      %20 = vector.load %arg5[%c0, %c0_6, %c0_7] : memref<1x32x128xf32, #tpu.memory_space<vmem>>, vector<1x32x128xf32>
      %21 = vector.shape_cast %20 : vector<1x32x128xf32> to vector<32x128xf32>
      %22 = arith.index_cast %arg0 : i32 to index
      %23 = memref.load %arg3[%22] : memref<2xf32, #tpu.memory_space<smem>>
      %24 = tpu.iota {dimensions = array<i32: 1>} : vector<1x128xi32>
      %25 = tpu.iota {dimensions = array<i32: 0>} : vector<32x1xi32>
      %26 = vector.broadcast %9 : i32 to vector<32x1xi32>
      %27 = arith.addi %25, %26 : vector<32x1xi32>
      %c2_i32 = arith.constant 2 : i32
      %28 = arith.addi %0, %c2_i32 : i32
      %false = arith.constant false
      %29 = vector.broadcast %false : i1 to vector<1x128xi1>
      %30 = arith.index_cast %28 : i32 to index
      %31 = memref.load %arg2[%30] : memref<12xi32, #tpu.memory_space<smem>>
      %c1_i32_8 = arith.constant 1 : i32
      %32 = arith.addi %28, %c1_i32_8 : i32
      %33 = arith.index_cast %32 : i32 to index
      %34 = memref.load %arg2[%33] : memref<12xi32, #tpu.memory_space<smem>>
      %c2_i32_9 = arith.constant 2 : i32
      %35 = arith.addi %28, %c2_i32_9 : i32
      %36 = vector.broadcast %31 : i32 to vector<1x128xi32>
      %37 = arith.cmpi sge, %24, %36 : vector<1x128xi32>
      %38 = vector.broadcast %34 : i32 to vector<1x128xi32>
      %39 = arith.cmpi slt, %24, %38 : vector<1x128xi32>
      %40 = arith.andi %37, %39 : vector<1x128xi1>
      %41 = arith.ori %29, %40 : vector<1x128xi1>
      %false_10 = arith.constant false
      %42 = vector.broadcast %false_10 : i1 to vector<32x1xi1>
      %43 = arith.index_cast %35 : i32 to index
      %44 = memref.load %arg2[%43] : memref<12xi32, #tpu.memory_space<smem>>
      %c1_i32_11 = arith.constant 1 : i32
      %45 = arith.addi %35, %c1_i32_11 : i32
      %46 = arith.index_cast %45 : i32 to index
      %47 = memref.load %arg2[%46] : memref<12xi32, #tpu.memory_space<smem>>
      %48 = vector.broadcast %44 : i32 to vector<32x1xi32>
      %49 = arith.cmpi sge, %27, %48 : vector<32x1xi32>
      %50 = vector.broadcast %47 : i32 to vector<32x1xi32>
      %51 = arith.cmpi slt, %27, %50 : vector<32x1xi32>
      %52 = arith.andi %49, %51 : vector<32x1xi1>
      %53 = arith.ori %42, %52 : vector<32x1xi1>
      %54 = vector.broadcast %41 : vector<1x128xi1> to vector<32x128xi1>
      %55 = vector.broadcast %53 : vector<32x1xi1> to vector<32x128xi1>
      %56 = arith.ori %54, %55 : vector<32x128xi1>
      %57 = vector.broadcast %23 : f32 to vector<32x128xf32>
      %58 = arith.select %56, %57, %21 : vector<32x128xi1>, vector<32x128xf32>
      %c0_12 = arith.constant 0 : index
      %c0_13 = arith.constant 0 : index
      %c0_14 = arith.constant 0 : index
      %59 = vector.load %arg9[%c0_12, %c0_13, %c0_14] : memref<1x32x128xf32, #tpu.memory_space<vmem>>, vector<1x32x128xf32>
      %60 = vector.shape_cast %59 : vector<1x32x128xf32> to vector<32x128xf32>
      %61 = vector.shape_cast %58 : vector<32x128xf32> to vector<1x32x128xf32>
      tpu.vector_store %arg9[%c0_12, %c0_13, %c0_14], %61 {strides = array<i32>} : memref<1x32x128xf32, #tpu.memory_space<vmem>>, vector<1x32x128xf32>,
    } else {
    }
    return
  }
  func.func @transform_0(%arg0: i32, %arg1: i32, %arg2: memref<12xi32, #tpu.memory_space<smem>>) -> i32 {
    %c0_i32 = arith.constant 0 : i32
    %c0_i32_0 = arith.constant 0 : i32
    return %c0_i32 : i32
  }
  func.func @transform_1(%arg0: i32, %arg1: i32, %arg2: memref<12xi32, #tpu.memory_space<smem>>) -> (i32, i32, i32) {
    %c1_i32 = arith.constant 1 : i32
    %0 = arith.subi %arg1, %c1_i32 : i32
    %c0_i32 = arith.constant 0 : i32
    %1 = arith.maxsi %0, %c0_i32 : i32
    %c0_i32_0 = arith.constant 0 : i32
    %c0_i32_1 = arith.constant 0 : i32
    return %arg0, %1, %c0_i32_0 : i32, i32, i32
  }
  func.func @transform_2(%arg0: i32, %arg1: i32, %arg2: memref<12xi32, #tpu.memory_space<smem>>) -> (i32, i32, i32) {
    %c0_i32 = arith.constant 0 : i32
    %c0_i32_0 = arith.constant 0 : i32
    return %arg0, %arg1, %c0_i32 : i32, i32, i32
  }
  func.func @transform_3(%arg0: i32, %arg1: i32, %arg2: memref<12xi32, #tpu.memory_space<smem>>) -> (i32, i32, i32) {
    %c1_i32 = arith.constant 1 : i32
    %0 = arith.addi %arg1, %c1_i32 : i32
    %c0_i32 = arith.constant 0 : i32
    %1 = arith.minsi %0, %c0_i32 : i32
    %c0_i32_0 = arith.constant 0 : i32
    %c0_i32_1 = arith.constant 0 : i32
    return %arg0, %1, %c0_i32_0 : i32, i32, i32
  }
  func.func @transform_4(%arg0: i32, %arg1: i32, %arg2: memref<12xi32, #tpu.memory_space<smem>>) -> (i32, i32, i32) {
    %c0_i32 = arith.constant 0 : i32
    %c0_i32_0 = arith.constant 0 : i32
    return %arg0, %arg1, %c0_i32 : i32, i32, i32
  }
  func.func @transform_5(%arg0: i32, %arg1: i32, %arg2: memref<12xi32, #tpu.memory_space<smem>>) -> (i32, i32, i32) {
    %c0_i32 = arith.constant 0 : i32
    %c0_i32_0 = arith.constant 0 : i32
    return %arg0, %arg1, %c0_i32 : i32, i32, i32
  }
  func.func @transform_6(%arg0: i32, %arg1: i32, %arg2: memref<12xi32, #tpu.memory_space<smem>>) -> (i32, i32, i32) {
    %c0_i32 = arith.constant 0 : i32
    %c0_i32_0 = arith.constant 0 : i32
    return %arg0, %arg1, %c0_i32 : i32, i32, i32
  }
}

</mosaic_0001>

<llo_original>
// kernel: tpu_custom_call.1
$region0: #{tpu_custom_call.1}
  #allocation0 [shape = 'u32[]', space=smem, size = 0x4, offset = 0x4, fixed_abs, tag = 'smem constant byte address 0x4 - core index']
  #allocation1 [shape = 'u32[72,128]{1,0:T(1,128)}', space=vmem, size = 0x9000, scoped, tag = 'internal scratch']
  #allocation2 [shape = 's32[1]{0}', space=sflag, size = 0x4, scoped, tag = 'scoped memory for tpu_custom_call.1']
  #allocation3 [shape = 'u8[512]{0}', space=smem, size = 0x200, scoped, tag = 'prefetched SMEM operand 0']
  %s0 = inlined_call_operand.vmem [shape: s32[12], index: 0, kind: input, shape index: {}]
  %s1 = inlined_call_operand.vmem [shape: f32[2], index: 1, kind: input, shape index: {}]
  %s2 = inlined_call_operand.vmem [shape: f32[2,32,128], index: 2, kind: input, shape index: {}]
  %s3 = inlined_call_operand.vmem [shape: f32[2,32,128], index: 3, kind: input, shape index: {}]
  %s4 = inlined_call_operand.hbm [shape: f32[2,32,128], index: 4, kind: input, shape index: {}]
  %s5 = inlined_call_operand.vmem [shape: s32[2,32,1], index: 5, kind: input, shape index: {}]
  %s6 = inlined_call_operand.vmem [shape: f32[2,32,4], index: 6, kind: input, shape index: {}]
  %s7 = inlined_call_operand.hbm [shape: f32[2,32,128], index: 7, kind: output, shape index: {}]
  %s8 = sld [smem:[#allocation0]]
  $region77: #{tpu_custom_call.1} parent=0
    _
  %s10 = ssub.s32 1, %s8
  %s11 = scalar_select 0, %s10, %s8
  %s13 = sshll.u32 %s0, 4
  %s14 = int_to_ptr.vmem [resolvable:$true] %s13
  %16 = dma.vmem_to_smem %s14, 16, [#allocation3], [#allocation2]
  %18 = dma.done [#allocation2], 16
  %19 = sfence
  $region1: #{tpu_custom_call.1} parent=0
    #allocation4 [shape = 'u8[512]{0}', space=smem, size = 0x200, scoped, tag = 'input window, operand 1, single buffered']
    #allocation5 [shape = 's32[2]{0}', space=sflag, size = 0x8, scoped, tag = 'scoped memory for tpu_custom_call.1']
    #allocation6 [shape = 's32[2]{0}', space=sflag, size = 0x8, scoped, tag = 'scoped memory for tpu_custom_call.1']
    #allocation7 [shape = 's32[2]{0}', space=sflag, size = 0x8, scoped, tag = 'scoped memory for tpu_custom_call.1']
    #allocation8 [shape = 'u8[32768]{0}', space=vmem, size = 0x8000, scoped, tag = 'input window, operand 4']
    #allocation9 [shape = 'u8[32768]{0}', space=vmem, size = 0x8000, scoped, tag = 'output window, operand 0']
    %20 = vsyncpa [#allocation7], 0
    %21 = vsyncpa [#allocation5], 0
    %s22 = scalar_lea.sflag [#allocation5], 1
    %23 = vsyncpa %s22, 0
    %24 = vsyncpa [#allocation6], 0
    %s25 = scalar_lea.sflag [#allocation6], 1
    %26 = vsyncpa %s25, 0
    loop: start=0, step=1, limit=4
    $region2: #{tpu_custom_call.1} parent=1 // loop_pre_header
      _
    $region3: #{tpu_custom_call.1} parent=1 // loop_header
      %s28 = sphi 0, %s32
      %p29 = scmp.ge.s32.totalorder %s28, 4
      %s35 = sphi 0, %s47
      %s36 = sphi 0, %s43
      %s37 = sphi 0, %s35
      %s38 = sphi 0, %s36
      %s39 = sphi 0, %s37
      %s40 = sphi 0, %s38
      %s48 = sphi 0, %s48
      %s50 = sphi 0, %s48
      %s51 = sphi 0, %s50
      %s65 = sphi 0, %s51
      %s79 = sphi 0, %s81
      %s82 = sphi 0, %s79
      %s83 = sphi 0, %s82
      %s99 = sphi 0, %s83
      %s107 = sphi 0, %s109
      %s110 = sphi 0, %s107
      %s111 = sphi 0, %s110
      %s127 = sphi 0, %s111
      %s141 = sphi 0, %s143
      %s144 = sphi 0, %s141
      %s145 = sphi 0, %s144
      %s161 = sphi 0, %s145
      %s169 = sphi 0, %s171
      %s172 = sphi 0, %s169
      %s173 = sphi 0, %s172
      %s189 = sphi 0, %s173
      %s197 = sphi 0, %s199
      %s200 = sphi 0, %s197
      %s201 = sphi 0, %s200
      %s217 = sphi 0, %s201
      %s225 = sphi 0, %s227
      %s228 = sphi 0, %s225
      %s229 = sphi 0, %s228
      %s245 = sphi 0, %s229
    $region4: #{tpu_custom_call.1} parent=1 // loop_header_branch
      %31 = sbr.rel (%p29) target = $region8
    $region5: #{tpu_custom_call.1} parent=1 // loop_body
      %s33 = ssub.s32 %s28, 1
      %s34 = ssub.s32 %s28, 2
      %s41 = sadd.s32 1, %s36
      %p42 = scmp.ge.s32.totalorder %s41, 1
      %s43 = scalar_select %p42, 0, %s41
      %s44 = sadd.s32 1, %s35
      %s45 = scalar_select %p42, %s44, %s35
      %p46 = scmp.ge.s32.totalorder %s45, 2
      %s47 = scalar_select %p46, 0, %s45
      %s49 = sadd.s32 %s48, 1
      %p52 = scmp.eq.s32.totalorder %s28, 1
      %p53 = scmp.ne.s32.totalorder %s48, %s50
      %p54 = scmp.eq.s32.totalorder %s28, 0
      %p55 = por %p53, %p54
      %p56 = scmp.ne.s32.totalorder %s48, %s50
      %p57 = scmp.eq.s32.totalorder %s33, 1
      %p58 = por %p56, %p57
      %p59 = scmp.ne.s32.totalorder %s50, %s51
      %p60 = scmp.eq.s32.totalorder %s33, 0
      %p61 = por %p59, %p60
      %p62 = scmp.ne.s32.totalorder %s50, %s51
      %p63 = scmp.eq.s32.totalorder %s34, 1
      %p64 = por %p62, %p63
      %p66 = scmp.ne.s32.totalorder %s51, %s65
      %p67 = scmp.eq.s32.totalorder %s34, 0
      %p68 = por %p66, %p67
      %s69 = ssub.s32 %s36, 1
      %p70 = scmp.gt.s32.totalorder %s69, 0
      %s71 = scalar_select %p70, %s69, 0
      %s72 = ssub.s32 %s43, 1
      %p73 = scmp.gt.s32.totalorder %s72, 0
      %s74 = scalar_select %p73, %s72, 0
      %s75 = ssub.s32 %s35, %s47
      %s76 = ssub.s32 %s71, %s74
      %s77 = sor.u32 %s75, %s76
      %p78 = scmp.eq.s32.totalorder %s77, 0
      %s80 = sadd.s32 %s79, 1
      %s81 = scalar_select %p78, %s79, %s80
      %p84 = pneg %p78
      %p85 = scmp.eq.s32.totalorder %s28, 1
      %p86 = por %p84, %p85
      %p87 = scmp.ne.s32.totalorder %s79, %s82
      %p88 = scmp.eq.s32.totalorder %s28, 0
      %p89 = por %p87, %p88
      %p90 = scmp.ne.s32.totalorder %s79, %s82
      %p91 = scmp.eq.s32.totalorder %s33, 1
      %p92 = por %p90, %p91
      %p93 = scmp.ne.s32.totalorder %s82, %s83
      %p94 = scmp.eq.s32.totalorder %s33, 0
      %p95 = por %p93, %p94
      %p96 = scmp.ne.s32.totalorder %s82, %s83
      %p97 = scmp.eq.s32.totalorder %s34, 1
      %p98 = por %p96, %p97
      %p100 = scmp.ne.s32.totalorder %s83, %s99
      %p101 = scmp.eq.s32.totalorder %s34, 0
      %p102 = por %p100, %p101
      %s103 = ssub.s32 %s35, %s47
      %s104 = ssub.s32 %s36, %s43
      %s105 = sor.u32 %s103, %s104
      %p106 = scmp.eq.s32.totalorder %s105, 0
      %s108 = sadd.s32 %s107, 1
      %s109 = scalar_select %p106, %s107, %s108
      %p112 = pneg %p106
      %p113 = scmp.eq.s32.totalorder %s28, 1
      %p114 = por %p112, %p113
      %p115 = scmp.ne.s32.totalorder %s107, %s110
      %p116 = scmp.eq.s32.totalorder %s28, 0
      %p117 = por %p115, %p116
      %p118 = scmp.ne.s32.totalorder %s107, %s110
      %p119 = scmp.eq.s32.totalorder %s33, 1
      %p120 = por %p118, %p119
      %p121 = scmp.ne.s32.totalorder %s110, %s111
      %p122 = scmp.eq.s32.totalorder %s33, 0
      %p123 = por %p121, %p122
      %p124 = scmp.ne.s32.totalorder %s110, %s111
      %p125 = scmp.eq.s32.totalorder %s34, 1
      %p126 = por %p124, %p125
      %p128 = scmp.ne.s32.totalorder %s111, %s127
      %p129 = scmp.eq.s32.totalorder %s34, 0
      %p130 = por %p128, %p129
      %s131 = sadd.s32 %s36, 1
      %p132 = scmp.lt.s32.totalorder %s131, 0
      %s133 = scalar_select %p132, %s131, 0
      %s134 = sadd.s32 %s43, 1
      %p135 = scmp.lt.s32.totalorder %s134, 0
      %s136 = scalar_select %p135, %s134, 0
      %s137 = ssub.s32 %s35, %s47
      %s138 = ssub.s32 %s133, %s136
      %s139 = sor.u32 %s137, %s138
      %p140 = scmp.eq.s32.totalorder %s139, 0
      %s142 = sadd.s32 %s141, 1
      %s143 = scalar_select %p140, %s141, %s142
      %p146 = pneg %p140
      %p147 = scmp.eq.s32.totalorder %s28, 1
      %p148 = por %p146, %p147
      %p149 = scmp.ne.s32.totalorder %s141, %s144
      %p150 = scmp.eq.s32.totalorder %s28, 0
      %p151 = por %p149, %p150
      %p152 = scmp.ne.s32.totalorder %s141, %s144
      %p153 = scmp.eq.s32.totalorder %s33, 1
      %p154 = por %p152, %p153
      %p155 = scmp.ne.s32.totalorder %s144, %s145
      %p156 = scmp.eq.s32.totalorder %s33, 0
      %p157 = por %p155, %p156
      %p158 = scmp.ne.s32.totalorder %s144, %s145
      %p159 = scmp.eq.s32.totalorder %s34, 1
      %p160 = por %p158, %p159
      %p162 = scmp.ne.s32.totalorder %s145, %s161
      %p163 = scmp.eq.s32.totalorder %s34, 0
      %p164 = por %p162, %p163
      %s165 = ssub.s32 %s35, %s47
      %s166 = ssub.s32 %s36, %s43
      %s167 = sor.u32 %s165, %s166
      %p168 = scmp.eq.s32.totalorder %s167, 0
      %s170 = sadd.s32 %s169, 1
      %s171 = scalar_select %p168, %s169, %s170
      %p174 = pneg %p168
      %p175 = scmp.eq.s32.totalorder %s28, 1
      %p176 = por %p174, %p175
      %p177 = scmp.ne.s32.totalorder %s169, %s172
      %p178 = scmp.eq.s32.totalorder %s28, 0
      %p179 = por %p177, %p178
      %p180 = scmp.ne.s32.totalorder %s169, %s172
      %p181 = scmp.eq.s32.totalorder %s33, 1
      %p182 = por %p180, %p181
      %p183 = scmp.ne.s32.totalorder %s172, %s173
      %p184 = scmp.eq.s32.totalorder %s33, 0
      %p185 = por %p183, %p184
      %p186 = scmp.ne.s32.totalorder %s172, %s173
      %p187 = scmp.eq.s32.totalorder %s34, 1
      %p188 = por %p186, %p187
      %p190 = scmp.ne.s32.totalorder %s173, %s189
      %p191 = scmp.eq.s32.totalorder %s34, 0
      %p192 = por %p190, %p191
      %s193 = ssub.s32 %s35, %s47
      %s194 = ssub.s32 %s36, %s43
      %s195 = sor.u32 %s193, %s194
      %p196 = scmp.eq.s32.totalorder %s195, 0
      %s198 = sadd.s32 %s197, 1
      %s199 = scalar_select %p196, %s197, %s198
      %p202 = pneg %p196
      %p203 = scmp.eq.s32.totalorder %s28, 1
      %p204 = por %p202, %p203
      %p205 = scmp.ne.s32.totalorder %s197, %s200
      %p206 = scmp.eq.s32.totalorder %s28, 0
      %p207 = por %p205, %p206
      %p208 = scmp.ne.s32.totalorder %s197, %s200
      %p209 = scmp.eq.s32.totalorder %s33, 1
      %p210 = por %p208, %p209
      %p211 = scmp.ne.s32.totalorder %s200, %s201
      %p212 = scmp.eq.s32.totalorder %s33, 0
      %p213 = por %p211, %p212
      %p214 = scmp.ne.s32.totalorder %s200, %s201
      %p215 = scmp.eq.s32.totalorder %s34, 1
      %p216 = por %p214, %p215
      %p218 = scmp.ne.s32.totalorder %s201, %s217
      %p219 = scmp.eq.s32.totalorder %s34, 0
      %p220 = por %p218, %p219
      %s221 = ssub.s32 %s35, %s47
      %s222 = ssub.s32 %s36, %s43
      %s223 = sor.u32 %s221, %s222
      %p224 = scmp.eq.s32.totalorder %s223, 0
      %s226 = sadd.s32 %s225, 1
      %s227 = scalar_select %p224, %s225, %s226
      %p230 = pneg %p224
      %p231 = scmp.eq.s32.totalorder %s28, 1
      %p232 = por %p230, %p231
      %p233 = scmp.ne.s32.totalorder %s225, %s228
      %p234 = scmp.eq.s32.totalorder %s28, 0
      %p235 = por %p233, %p234
      %p236 = scmp.ne.s32.totalorder %s225, %s228
      %p237 = scmp.eq.s32.totalorder %s33, 1
      %p238 = por %p236, %p237
      %p239 = scmp.ne.s32.totalorder %s228, %s229
      %p240 = scmp.eq.s32.totalorder %s33, 0
      %p241 = por %p239, %p240
      %p242 = scmp.ne.s32.totalorder %s228, %s229
      %p243 = scmp.eq.s32.totalorder %s34, 1
      %p244 = por %p242, %p243
      %p246 = scmp.ne.s32.totalorder %s229, %s245
      %p247 = scmp.eq.s32.totalorder %s34, 0
      %p248 = por %p246, %p247
      %p249 = scmp.le.s32.totalorder 1, %s28
      %p250 = scmp.lt.s32.totalorder %s28, 3
      %p251 = pnand %p249, %p250
      %p252 = pneg %p251
      // Predicated region
      $region9: #{tpu_custom_call.1} parent=5 // pred_check
        _
      $region10: #{tpu_custom_call.1} parent=5 // pred_check_branch
        %254 = sbr.rel (%p251) target = $region12
      $region11: #{tpu_custom_call.1} parent=5 // pred_region
        %s255 = ssub.s32 %s28, 1
        // Predicated region
        $region13: #{tpu_custom_call.1} parent=11 // pred_check
          %p256 = pneg %p61
        $region14: #{tpu_custom_call.1} parent=11 // pred_check_branch
          %258 = sbr.rel (%p256) target = $region16
        $region15: #{tpu_custom_call.1} parent=11 // pred_region
          %260 = vsyncadd [#allocation7], 0
          %s262 = sshll.u32 %s1, 4
          %s263 = int_to_ptr.vmem [resolvable:$true] %s262
          %265 = dma.vmem_to_smem %s263, 16, [#allocation4], [#allocation7]
        $region16: #{tpu_custom_call.1} parent=11 // pred_fallthru
          _
      $region12: #{tpu_custom_call.1} parent=5 // pred_fallthru
        _
      %p266 = scmp.lt.s32.totalorder %s28, 2
      // Predicated region
      $region17: #{tpu_custom_call.1} parent=5 // pred_check
        %p267 = pneg %p266
      $region18: #{tpu_custom_call.1} parent=5 // pred_check_branch
        %269 = sbr.rel (%p267) target = $region20
      $region19: #{tpu_custom_call.1} parent=5 // pred_region
        // Predicated region
        $region21: #{tpu_custom_call.1} parent=19 // pred_check
          %p270 = pneg %p89
        $region22: #{tpu_custom_call.1} parent=19 // pred_check_branch
          %272 = sbr.rel (%p270) target = $region24
        $region23: #{tpu_custom_call.1} parent=19 // pred_region
          %s273 = ssub.s32 %s36, 1
          %p274 = scmp.gt.s32.totalorder %s273, 0
          %s275 = scalar_select %p274, %s273, 0
          %s276 = smul.u32 4, %s275
          %p277 = scmp.lt.s32.totalorder %s35, 1
          %s278 = scalar_select %p277, %s35, 1
          %p279 = scmp.lt.s32.totalorder %s276, 3
          %s280 = scalar_select %p279, %s276, 3
          %s281 = smul.addr %s278, 4
          %s282 = sadd.s32 %s280, %s281
          %s283 = smul.addr %s282, 8
          %s284 = scalar_lea.vmem %s2, %s283
          %s285 = ssub.s32 %s36, 1
          %p286 = scmp.gt.s32.totalorder %s285, 0
          %s287 = scalar_select %p286, %s285, 0
          %s288 = smul.u32 4, %s287
        $region24: #{tpu_custom_call.1} parent=19 // pred_fallthru
          _
        // Predicated region
        $region25: #{tpu_custom_call.1} parent=19 // pred_check
          %p289 = pneg %p117
        $region26: #{tpu_custom_call.1} parent=19 // pred_check_branch
          %291 = sbr.rel (%p289) target = $region28
        $region27: #{tpu_custom_call.1} parent=19 // pred_region
          %s292 = smul.u32 4, %s36
          %p293 = scmp.lt.s32.totalorder %s35, 1
          %s294 = scalar_select %p293, %s35, 1
          %p295 = scmp.lt.s32.totalorder %s292, 3
          %s296 = scalar_select %p295, %s292, 3
          %s297 = smul.addr %s294, 4
          %s298 = sadd.s32 %s296, %s297
          %s299 = smul.addr %s298, 8
          %s300 = scalar_lea.vmem %s3, %s299
          %s301 = smul.u32 4, %s36
        $region28: #{tpu_custom_call.1} parent=19 // pred_fallthru
          _
        // Predicated region
        $region29: #{tpu_custom_call.1} parent=19 // pred_check
          %p302 = pneg %p151
        $region30: #{tpu_custom_call.1} parent=19 // pred_check_branch
          %304 = sbr.rel (%p302) target = $region32
        $region31: #{tpu_custom_call.1} parent=19 // pred_region
          %s305 = sand.u32 %s141, 1
          %s306 = scalar_lea.sflag [#allocation5], %s305
          %s307 = sand.u32 %s141, 1
          %s308 = smul.addr %s307, 32
          %s309 = scalar_lea.vmem [#allocation8], %s308
          %s310 = sadd.s32 %s36, 1
          %p311 = scmp.lt.s32.totalorder %s310, 0
          %s312 = scalar_select %p311, %s310, 0
          %s313 = smul.u32 4, %s312
          %315 = vsyncadd %s306, 0
          %s316 = smul.addr %s35, 4
          %s317 = sadd.s32 %s313, %s316
          %s318 = smul.addr %s317, 8
          %s319 = scalar_lea.hbm %s4, %s318
          %s320 = sshll.u32 %s319, 4
          %s321 = int_to_ptr.hbm [resolvable:$true] %s320
          %s322 = sshll.u32 %s309, 4
          %s323 = int_to_ptr.vmem [resolvable:$true] %s322
          %328 = dma.hbm_to_vmem [thread:$0]  %s321, 512, %s323, %s306, 128, 128, 8
        $region32: #{tpu_custom_call.1} parent=19 // pred_fallthru
          _
        // Predicated region
        $region33: #{tpu_custom_call.1} parent=19 // pred_check
          %p329 = pneg %p179
        $region34: #{tpu_custom_call.1} parent=19 // pred_check_branch
          %331 = sbr.rel (%p329) target = $region36
        $region35: #{tpu_custom_call.1} parent=19 // pred_region
          %s332 = smul.u32 4, %s36
          %p333 = scmp.lt.s32.totalorder %s35, 1
          %s334 = scalar_select %p333, %s35, 1
          %p335 = scmp.lt.s32.totalorder %s332, 3
          %s336 = scalar_select %p335, %s332, 3
          %s337 = smul.addr %s334, 4
          %s338 = sadd.s32 %s336, %s337
          %s339 = smul.addr %s338, 8
          %s340 = scalar_lea.vmem %s5, %s339
          %s341 = smul.u32 4, %s36
        $region36: #{tpu_custom_call.1} parent=19 // pred_fallthru
          _
        // Predicated region
        $region37: #{tpu_custom_call.1} parent=19 // pred_check
          %p342 = pneg %p207
        $region38: #{tpu_custom_call.1} parent=19 // pred_check_branch
          %344 = sbr.rel (%p342) target = $region40
        $region39: #{tpu_custom_call.1} parent=19 // pred_region
          %s345 = smul.u32 4, %s36
          %p346 = scmp.lt.s32.totalorder %s35, 1
          %s347 = scalar_select %p346, %s35, 1
          %p348 = scmp.lt.s32.totalorder %s345, 3
          %s349 = scalar_select %p348, %s345, 3
          %s350 = smul.addr %s347, 4
          %s351 = sadd.s32 %s349, %s350
          %s352 = smul.addr %s351, 8
          %s353 = scalar_lea.vmem %s6, %s352
          %s354 = smul.u32 4, %s36
        $region40: #{tpu_custom_call.1} parent=19 // pred_fallthru
          _
      $region20: #{tpu_custom_call.1} parent=5 // pred_fallthru
        _
      %p355 = scmp.le.s32.totalorder 1, %s28
      %p356 = scmp.lt.s32.totalorder %s28, 3
      %p357 = pnand %p355, %p356
      %p358 = pneg %p357
      // Predicated region
      $region41: #{tpu_custom_call.1} parent=5 // pred_check
        _
      $region42: #{tpu_custom_call.1} parent=5 // pred_check_branch
        %360 = sbr.rel (%p357) target = $region44
      $region43: #{tpu_custom_call.1} parent=5 // pred_region
        %s361 = ssub.s32 %s28, 1
        // Predicated region
        $region45: #{tpu_custom_call.1} parent=43 // pred_check
          %p362 = pneg %p61
        $region46: #{tpu_custom_call.1} parent=43 // pred_check_branch
          %364 = sbr.rel (%p362) target = $region48
        $region47: #{tpu_custom_call.1} parent=43 // pred_region
          %366 = dma.done [#allocation7], 16
        $region48: #{tpu_custom_call.1} parent=43 // pred_fallthru
          _
        %s367 = sand.u32 %s144, 1
        %s368 = scalar_lea.sflag [#allocation5], %s367
        %s369 = sand.u32 %s144, 1
        %s370 = smul.addr %s369, 32
        %s371 = scalar_lea.vmem [#allocation8], %s370
        // Predicated region
        $region49: #{tpu_custom_call.1} parent=43 // pred_check
          %p372 = pneg %p157
        $region50: #{tpu_custom_call.1} parent=43 // pred_check_branch
          %374 = sbr.rel (%p372) target = $region52
        $region51: #{tpu_custom_call.1} parent=43 // pred_region
          %376 = dma.done %s368, 512
        $region52: #{tpu_custom_call.1} parent=43 // pred_fallthru
          _
        %377 = sfence
        %p378 = pneg %p61
        %p379 = pneg %p58
        %s380 = ssub.s32 %s38, 1
        %p381 = scmp.gt.s32.totalorder %s380, 0
        %s382 = scalar_select %p381, %s380, 0
        %s383 = smul.u32 4, %s382
        %p384 = scmp.lt.s32.totalorder %s37, 1
        %s385 = scalar_select %p384, %s37, 1
        %p386 = scmp.lt.s32.totalorder %s383, 3
        %s387 = scalar_select %p386, %s383, 3
        %s388 = smul.addr %s385, 4
        %s389 = sadd.s32 %s387, %s388
        %s390 = smul.addr %s389, 8
        %s391 = scalar_lea.vmem %s2, %s390
        %p392 = pneg %p95
        %p393 = pneg %p92
        %s394 = smul.u32 4, %s38
        %p395 = scmp.lt.s32.totalorder %s37, 1
        %s396 = scalar_select %p395, %s37, 1
        %p397 = scmp.lt.s32.totalorder %s394, 3
        %s398 = scalar_select %p397, %s394, 3
        %s399 = smul.addr %s396, 4
        %s400 = sadd.s32 %s398, %s399
        %s401 = smul.addr %s400, 8
        %s402 = scalar_lea.vmem %s3, %s401
        %p403 = pneg %p123
        %p404 = pneg %p120
        %s405 = sand.u32 %s144, 1
        %s406 = scalar_lea.sflag [#allocation5], %s405
        %s407 = sand.u32 %s144, 1
        %s408 = smul.addr %s407, 32
        %s409 = scalar_lea.vmem [#allocation8], %s408
        %p410 = pneg %p157
        %p411 = pneg %p154
        %s412 = smul.u32 4, %s38
        %p413 = scmp.lt.s32.totalorder %s37, 1
        %s414 = scalar_select %p413, %s37, 1
        %p415 = scmp.lt.s32.totalorder %s412, 3
        %s416 = scalar_select %p415, %s412, 3
        %s417 = smul.addr %s414, 4
        %s418 = sadd.s32 %s416, %s417
        %s419 = smul.addr %s418, 8
        %s420 = scalar_lea.vmem %s5, %s419
        %p421 = pneg %p185
        %p422 = pneg %p182
        %s423 = smul.u32 4, %s38
        %p424 = scmp.lt.s32.totalorder %s37, 1
        %s425 = scalar_select %p424, %s37, 1
        %p426 = scmp.lt.s32.totalorder %s423, 3
        %s427 = scalar_select %p426, %s423, 3
        %s428 = smul.addr %s425, 4
        %s429 = sadd.s32 %s427, %s428
        %s430 = smul.addr %s429, 8
        %s431 = scalar_lea.vmem %s6, %s430
        %p432 = pneg %p213
        %p433 = pneg %p210
        %p434 = pneg %p241
        %p435 = pneg %p238
        %s436 = sand.u32 %s228, 1
        %s437 = scalar_lea.sflag [#allocation6], %s436
        %s438 = sand.u32 %s228, 1
        %s439 = smul.addr %s438, 32
        %s440 = scalar_lea.vmem [#allocation9], %s439
        %s441 = ssub.s32 %s38, 1
        %p442 = scmp.gt.s32.totalorder %s441, 0
        %s443 = scalar_select %p442, %s441, 0
        %s444 = smul.u32 4, %s443
        %p445 = scmp.lt.s32.totalorder %s37, 1
        %s446 = scalar_select %p445, %s37, 1
        %p447 = scmp.lt.s32.totalorder %s444, 3
        %s448 = scalar_select %p447, %s444, 3
        %s449 = smul.addr %s446, 4
        %s450 = sadd.s32 %s448, %s449
        %s451 = smul.addr %s450, 8
        %s452 = scalar_lea.vmem %s2, %s451
        %s453 = ssub.s32 %s38, 1
        %p454 = scmp.gt.s32.totalorder %s453, 0
        %s455 = scalar_select %p454, %s453, 0
        %s456 = smul.u32 4, %s455
        %s457 = smul.u32 4, %s38
        %p458 = scmp.lt.s32.totalorder %s37, 1
        %s459 = scalar_select %p458, %s37, 1
        %p460 = scmp.lt.s32.totalorder %s457, 3
        %s461 = scalar_select %p460, %s457, 3
        %s462 = smul.addr %s459, 4
        %s463 = sadd.s32 %s461, %s462
        %s464 = smul.addr %s463, 8
        %s465 = scalar_lea.vmem %s3, %s464
        %s466 = smul.u32 4, %s38
        %s467 = sadd.s32 %s38, 1
        %p468 = scmp.lt.s32.totalorder %s467, 0
        %s469 = scalar_select %p468, %s467, 0
        %s470 = smul.u32 4, %s469
        %s471 = smul.u32 4, %s38
        %p472 = scmp.lt.s32.totalorder %s37, 1
        %s473 = scalar_select %p472, %s37, 1
        %p474 = scmp.lt.s32.totalorder %s471, 3
        %s475 = scalar_select %p474, %s471, 3
        %s476 = smul.addr %s473, 4
        %s477 = sadd.s32 %s475, %s476
        %s478 = smul.addr %s477, 8
        %s479 = scalar_lea.vmem %s5, %s478
        %s480 = smul.u32 4, %s38
        %s481 = smul.u32 4, %s38
        %p482 = scmp.lt.s32.totalorder %s37, 1
        %s483 = scalar_select %p482, %s37, 1
        %p484 = scmp.lt.s32.totalorder %s481, 3
        %s485 = scalar_select %p484, %s481, 3
        %s486 = smul.addr %s483, 4
        %s487 = sadd.s32 %s485, %s486
        %s488 = smul.addr %s487, 8
        %s489 = scalar_lea.vmem %s6, %s488
        %s490 = smul.u32 4, %s38
        %s491 = smul.u32 4, %s38
        %s493 = smul.u32 %s37, 6
        %s494 = sld [smem:[#allocation3 + %s493]]
        %p495 = scmp.gt.s32.totalorder %s494, 0
        %s496 = sadd.s32 %s493, 1
        %s497 = sld [smem:[#allocation3 + %s496]]
        %p498 = scmp.gt.s32.totalorder %s497, 0
        %s499 = smul.u32 %s38, 32
        %p500 = scmp.le.s32.totalorder %s494, 0
        // Predicated region
        $region53: #{tpu_custom_call.1} parent=43 // pred_check
          %p501 = pneg %p500
        $region54: #{tpu_custom_call.1} parent=43 // pred_check_branch
          %503 = sbr.rel (%p501) target = $region56
        $region55: #{tpu_custom_call.1} parent=43 // pred_region
          %v504 = vld [vmem:[%s465] sm:$0xff]
          %v505 = vld [vmem:[%s465 + $0x8] sm:$0xff]
          %v506 = vld [vmem:[%s465 + $0x10] sm:$0xff]
          %v507 = vld [vmem:[%s465 + $0x18] sm:$0xff]
          %508 = vst [vmem:[%s440] sm:$0xff] %v504
          %509 = vst [vmem:[%s440 + $0x8] sm:$0xff] %v505
          %510 = vst [vmem:[%s440 + $0x10] sm:$0xff] %v506
          %511 = vst [vmem:[%s440 + $0x18] sm:$0xff] %v507
        $region56: #{tpu_custom_call.1} parent=43 // pred_fallthru
          _
        %p512 = pnand %p495, %p498
        %p513 = pneg %p512
        // Predicated region
        $region57: #{tpu_custom_call.1} parent=43 // pred_check
          _
        $region58: #{tpu_custom_call.1} parent=43 // pred_check_branch
          %515 = sbr.rel (%p512) target = $region60
        $region59: #{tpu_custom_call.1} parent=43 // pred_region
          %v516 = vld [vmem:[%s479] sm:$0xff]
          %v517 = vld [vmem:[%s479 + $0x8] sm:$0xff]
          %v518 = vld [vmem:[%s479 + $0x10] sm:$0xff]
          %v519 = vld [vmem:[%s479 + $0x18] sm:$0xff]
          %v520 = vld [vmem:[%s489] sm:$0xff]
          %v521 = vld [vmem:[%s489 + $0x8] sm:$0xff]
          %v522 = vld [vmem:[%s489 + $0x10] sm:$0xff]
          %v523 = vld [vmem:[%s489 + $0x18] sm:$0xff]
          %v524 = vlaneseq
          %v525 = vand.u32 %v524, 127
          %s526 = ssub.s32 %s499, 32
          %v527 = vstv %s526
          %v528 = vadd.s32 %v525, %v527
          %529 = vset.pattern.permute.xlu0 0
          %530 = vperm.xlu0 %529, %v516
          %v531 = vpop.permute.xlu0 %530
          %532 = vset.pattern.permute.xlu0 0
          %533 = vperm.xlu0 %532, %v517
          %v534 = vpop.permute.xlu0 %533
          %535 = vset.pattern.permute.xlu0 0
          %536 = vperm.xlu0 %535, %v518
          %v537 = vpop.permute.xlu0 %536
          %538 = vset.pattern.permute.xlu0 0
          %539 = vperm.xlu0 %538, %v519
          %v540 = vpop.permute.xlu0 %539
          %vm541 = vcmp.eq.s32.totalorder %v528, %v531
          %vm542 = vcmp.eq.s32.totalorder %v528, %v534
          %vm543 = vcmp.eq.s32.totalorder %v528, %v537
          %vm544 = vcmp.eq.s32.totalorder %v528, %v540
          %546 = vset.pattern.permute.xlu0 0
          %547 = vperm.xlu0 %546, %v520
          %v548 = vpop.permute.xlu0 %547
          %551 = vset.pattern.permute.xlu0 0
          %552 = vperm.xlu0 %551, %v521
          %v553 = vpop.permute.xlu0 %552
          %556 = vset.pattern.permute.xlu0 0
          %557 = vperm.xlu0 %556, %v522
          %v558 = vpop.permute.xlu0 %557
          %561 = vset.pattern.permute.xlu0 0
          %562 = vperm.xlu0 %561, %v523
          %v563 = vpop.permute.xlu0 %562
          %v565 = vsel %vm541, %v548, 0.0
          %v566 = vsel %vm542, %v553, 0.0
          %v567 = vsel %vm543, %v558, 0.0
          %v568 = vsel %vm544, %v563, 0.0
          %v569 = vadd.s32 %v516, 1
          %v570 = vadd.s32 %v517, 1
          %v571 = vadd.s32 %v518, 1
          %v572 = vadd.s32 %v519, 1
          %573 = vset.pattern.permute.xlu0 0
          %574 = vperm.xlu0 %573, %v569
          %v575 = vpop.permute.xlu0 %574
          %576 = vset.pattern.permute.xlu0 0
          %577 = vperm.xlu0 %576, %v570
          %v578 = vpop.permute.xlu0 %577
          %579 = vset.pattern.permute.xlu0 0
          %580 = vperm.xlu0 %579, %v571
          %v581 = vpop.permute.xlu0 %580
          %582 = vset.pattern.permute.xlu0 0
          %583 = vperm.xlu0 %582, %v572
          %v584 = vpop.permute.xlu0 %583
          %vm585 = vcmp.eq.s32.totalorder %v528, %v575
          %vm586 = vcmp.eq.s32.totalorder %v528, %v578
          %vm587 = vcmp.eq.s32.totalorder %v528, %v581
          %vm588 = vcmp.eq.s32.totalorder %v528, %v584
          %589 = vset.pattern.permute.xlu0 1
          %590 = vperm.xlu0 %589, %v520
          %v591 = vpop.permute.xlu0 %590
          %593 = vset.pattern.permute.xlu0 1
          %594 = vperm.xlu0 %593, %v521
          %v595 = vpop.permute.xlu0 %594
          %597 = vset.pattern.permute.xlu0 1
          %598 = vperm.xlu0 %597, %v522
          %v599 = vpop.permute.xlu0 %598
          %601 = vset.pattern.permute.xlu0 1
          %602 = vperm.xlu0 %601, %v523
          %v603 = vpop.permute.xlu0 %602
          %v605 = vsel %vm585, %v591, 0.0
          %v606 = vsel %vm586, %v595, 0.0
          %v607 = vsel %vm587, %v599, 0.0
          %v608 = vsel %vm588, %v603, 0.0
          %v609 = vadd.f32 %v565, %v605
          %v610 = vadd.f32 %v566, %v606
          %v611 = vadd.f32 %v567, %v607
          %v612 = vadd.f32 %v568, %v608
          %v613 = vadd.s32 %v516, 2
          %v614 = vadd.s32 %v517, 2
          %v615 = vadd.s32 %v518, 2
          %v616 = vadd.s32 %v519, 2
          %617 = vset.pattern.permute.xlu0 0
          %618 = vperm.xlu0 %617, %v613
          %v619 = vpop.permute.xlu0 %618
          %620 = vset.pattern.permute.xlu0 0
          %621 = vperm.xlu0 %620, %v614
          %v622 = vpop.permute.xlu0 %621
          %623 = vset.pattern.permute.xlu0 0
          %624 = vperm.xlu0 %623, %v615
          %v625 = vpop.permute.xlu0 %624
          %626 = vset.pattern.permute.xlu0 0
          %627 = vperm.xlu0 %626, %v616
          %v628 = vpop.permute.xlu0 %627
          %vm629 = vcmp.eq.s32.totalorder %v528, %v619
          %vm630 = vcmp.eq.s32.totalorder %v528, %v622
          %vm631 = vcmp.eq.s32.totalorder %v528, %v625
          %vm632 = vcmp.eq.s32.totalorder %v528, %v628
          %633 = vset.pattern.permute.xlu0 2
          %634 = vperm.xlu0 %633, %v520
          %v635 = vpop.permute.xlu0 %634
          %637 = vset.pattern.permute.xlu0 2
          %638 = vperm.xlu0 %637, %v521
          %v639 = vpop.permute.xlu0 %638
          %641 = vset.pattern.permute.xlu0 2
          %642 = vperm.xlu0 %641, %v522
          %v643 = vpop.permute.xlu0 %642
          %645 = vset.pattern.permute.xlu0 2
          %646 = vperm.xlu0 %645, %v523
          %v647 = vpop.permute.xlu0 %646
          %v649 = vsel %vm629, %v635, 0.0
          %v650 = vsel %vm630, %v639, 0.0
          %v651 = vsel %vm631, %v643, 0.0
          %v652 = vsel %vm632, %v647, 0.0
          %v653 = vadd.f32 %v609, %v649
          %v654 = vadd.f32 %v610, %v650
          %v655 = vadd.f32 %v611, %v651
          %v656 = vadd.f32 %v612, %v652
          %v657 = vadd.s32 %v516, 3
          %v658 = vadd.s32 %v517, 3
          %v659 = vadd.s32 %v518, 3
          %v660 = vadd.s32 %v519, 3
          %661 = vset.pattern.permute.xlu0 0
          %662 = vperm.xlu0 %661, %v657
          %v663 = vpop.permute.xlu0 %662
          %664 = vset.pattern.permute.xlu0 0
          %665 = vperm.xlu0 %664, %v658
          %v666 = vpop.permute.xlu0 %665
          %667 = vset.pattern.permute.xlu0 0
          %668 = vperm.xlu0 %667, %v659
          %v669 = vpop.permute.xlu0 %668
          %670 = vset.pattern.permute.xlu0 0
          %671 = vperm.xlu0 %670, %v660
          %v672 = vpop.permute.xlu0 %671
          %vm673 = vcmp.eq.s32.totalorder %v528, %v663
          %vm674 = vcmp.eq.s32.totalorder %v528, %v666
          %vm675 = vcmp.eq.s32.totalorder %v528, %v669
          %vm676 = vcmp.eq.s32.totalorder %v528, %v672
          %677 = vset.pattern.permute.xlu0 3
          %678 = vperm.xlu0 %677, %v520
          %v679 = vpop.permute.xlu0 %678
          %681 = vset.pattern.permute.xlu0 3
          %682 = vperm.xlu0 %681, %v521
          %v683 = vpop.permute.xlu0 %682
          %685 = vset.pattern.permute.xlu0 3
          %686 = vperm.xlu0 %685, %v522
          %v687 = vpop.permute.xlu0 %686
          %689 = vset.pattern.permute.xlu0 3
          %690 = vperm.xlu0 %689, %v523
          %v691 = vpop.permute.xlu0 %690
          %v693 = vsel %vm673, %v679, 0.0
          %v694 = vsel %vm674, %v683, 0.0
          %v695 = vsel %vm675, %v687, 0.0
          %v696 = vsel %vm676, %v691, 0.0
          %v697 = vadd.f32 %v653, %v693
          %v698 = vadd.f32 %v654, %v694
          %v699 = vadd.f32 %v655, %v695
          %v700 = vadd.f32 %v656, %v696
          %v701 = vpack.c.bf16 %v698, %v697
          %v702 = vpack.c.bf16 %v700, %v699
          %v703 = vld [vmem:[%s452] sm:$0xff]
          %v704 = vld [vmem:[%s452 + $0x8] sm:$0xff]
          %v705 = vld [vmem:[%s452 + $0x10] sm:$0xff]
          %v706 = vld [vmem:[%s452 + $0x18] sm:$0xff]
          %v707 = vld [vmem:[%s465] sm:$0xff]
          %v708 = vld [vmem:[%s465 + $0x8] sm:$0xff]
          %v709 = vld [vmem:[%s465 + $0x10] sm:$0xff]
          %v710 = vld [vmem:[%s465 + $0x18] sm:$0xff]
          %v711 = vld [vmem:[%s371] sm:$0xff]
          %v712 = vld [vmem:[%s371 + $0x8] sm:$0xff]
          %v713 = vld [vmem:[%s371 + $0x10] sm:$0xff]
          %v714 = vld [vmem:[%s371 + $0x18] sm:$0xff]
          %v715 = vpack.c.bf16 %v704, %v703
          %v716 = vpack.c.bf16 %v706, %v705
          %v717 = vpack.c.bf16 %v708, %v707
          %v718 = vpack.c.bf16 %v710, %v709
          %v719 = vpack.c.bf16 %v712, %v711
          %v720 = vpack.c.bf16 %v714, %v713
          %vm721 = vcmask 785408
          %v723 = vsel %vm721, %v701, 0
          %v726 = vsel %vm721, %v702, 0
          %728 = vmatpush.bf16.msra.mxu0 0
          %729 = vmatpush.bf16.msra.mxu0 0
          %730 = vmatpush.bf16.msra.mxu0 %v720
          %731 = vmatpush.bf16.msra.mxu0 %v719
          %732 = vmatpush.bf16.msra.mxu0 %v718
          %733 = vmatpush.bf16.msra.mxu0 %v717
          %734 = vmatpush.bf16.msra.mxu0 %v716
          %735 = vmatpush.bf16.msra.mxu0 %v715
          %736 = vmatmul.bf16.gmra.mxu0 %v723
          %v737 = vpop.f32.mrf.mxu0
          %v738 = vadd.f32 0.0, %v737
          %v739 = vpop.f32.mrf.mxu0
          %v740 = vadd.f32 0.0, %v739
          %741 = vmatmul.bf16.gmra.mxu0 %v726
          %v742 = vpop.f32.mrf.mxu0
          %v743 = vadd.f32 0.0, %v742
          %v744 = vpop.f32.mrf.mxu0
          %v745 = vadd.f32 0.0, %v744
          %746 = vdwg.mxu0
          %s747 = sld [smem:[#allocation4 + %s37]]
          %v748 = vlaneseq
          %v749 = vshrl.u32 %v748, 7
          %v750 = vadd.s32 %v749, 8
          %v751 = vadd.s32 %v749, 16
          %v752 = vadd.s32 %v749, 24
          %v753 = vstv %s499
          %v754 = vadd.s32 %v749, %v753
          %v755 = vadd.s32 %v750, %v753
          %v756 = vadd.s32 %v751, %v753
          %v757 = vadd.s32 %v752, %v753
          %s758 = sadd.s32 %s493, 2
          %s759 = sld [smem:[#allocation3 + %s758]]
          %s760 = sadd.s32 %s493, 3
          %s761 = sld [smem:[#allocation3 + %s760]]
          %s762 = sadd.s32 %s493, 4
          %v763 = vstv %s759
          %vm764 = vcmp.ge.s32.totalorder %v525, %v763
          %v765 = vstv %s761
          %vm766 = vcmp.lt.s32.totalorder %v525, %v765
          %vm767 = vmand %vm764, %vm766
          %s768 = sld [smem:[#allocation3 + %s762]]
          %s769 = sadd.s32 %s493, 5
          %s770 = sld [smem:[#allocation3 + %s769]]
          %v771 = vstv %s768
          %vm772 = vcmp.ge.s32.totalorder %v754, %v771
          %vm773 = vcmp.ge.s32.totalorder %v755, %v771
          %vm774 = vcmp.ge.s32.totalorder %v756, %v771
          %vm775 = vcmp.ge.s32.totalorder %v757, %v771
          %v776 = vstv %s770
          %vm777 = vcmp.lt.s32.totalorder %v754, %v776
          %vm778 = vcmp.lt.s32.totalorder %v755, %v776
          %vm779 = vcmp.lt.s32.totalorder %v756, %v776
          %vm780 = vcmp.lt.s32.totalorder %v757, %v776
          %vm781 = vmand %vm772, %vm777
          %vm782 = vmand %vm773, %vm778
          %vm783 = vmand %vm774, %vm779
          %vm784 = vmand %vm775, %vm780
          %v785 = vsel %vm767, 1, 0
          %vm786 = vcmp.eq.s32.totalorder %v785, 1
          %v787 = vsel %vm781, 1, 0
          %v788 = vsel %vm782, 1, 0
          %v789 = vsel %vm783, 1, 0
          %v790 = vsel %vm784, 1, 0
          %vm791 = vcmp.eq.s32.totalorder %v787, 1
          %vm792 = vcmp.eq.s32.totalorder %v788, 1
          %vm793 = vcmp.eq.s32.totalorder %v789, 1
          %vm794 = vcmp.eq.s32.totalorder %v790, 1
          %vm795 = vmor %vm786, %vm791
          %vm796 = vmor %vm786, %vm792
          %vm797 = vmor %vm786, %vm793
          %vm798 = vmor %vm786, %vm794
          %v799 = vstv %s747
          %v800 = vsel %vm795, %v799, %v738
          %v801 = vsel %vm796, %v799, %v740
          %v802 = vsel %vm797, %v799, %v743
          %v803 = vsel %vm798, %v799, %v745
          %804 = vst [vmem:[%s440] sm:$0xff] %v800
          %805 = vst [vmem:[%s440 + $0x8] sm:$0xff] %v801
          %806 = vst [vmem:[%s440 + $0x10] sm:$0xff] %v802
          %807 = vst [vmem:[%s440 + $0x18] sm:$0xff] %v803
        $region60: #{tpu_custom_call.1} parent=43 // pred_fallthru
          _
        %p808 = scmp.le.s32.totalorder %s497, 0
        %p809 = pnand %p495, %p808
        %p810 = pneg %p809
        // Predicated region
        $region61: #{tpu_custom_call.1} parent=43 // pred_check
          _
        $region62: #{tpu_custom_call.1} parent=43 // pred_check_branch
          %812 = sbr.rel (%p809) target = $region64
        $region63: #{tpu_custom_call.1} parent=43 // pred_region
          %v813 = vld [vmem:[%s465] sm:$0xff]
          %v814 = vld [vmem:[%s465 + $0x8] sm:$0xff]
          %v815 = vld [vmem:[%s465 + $0x10] sm:$0xff]
          %v816 = vld [vmem:[%s465 + $0x18] sm:$0xff]
          %s817 = sld [smem:[#allocation4 + %s37]]
          %v818 = vlaneseq
          %v819 = vand.u32 %v818, 127
          %v820 = vlaneseq
          %v821 = vshrl.u32 %v820, 7
          %v822 = vadd.s32 %v821, 8
          %v823 = vadd.s32 %v821, 16
          %v824 = vadd.s32 %v821, 24
          %v825 = vstv %s499
          %v826 = vadd.s32 %v821, %v825
          %v827 = vadd.s32 %v822, %v825
          %v828 = vadd.s32 %v823, %v825
          %v829 = vadd.s32 %v824, %v825
          %s830 = sadd.s32 %s493, 2
          %s831 = sld [smem:[#allocation3 + %s830]]
          %s832 = sadd.s32 %s493, 3
          %s833 = sld [smem:[#allocation3 + %s832]]
          %s834 = sadd.s32 %s493, 4
          %v835 = vstv %s831
          %vm836 = vcmp.ge.s32.totalorder %v819, %v835
          %v837 = vstv %s833
          %vm838 = vcmp.lt.s32.totalorder %v819, %v837
          %vm839 = vmand %vm836, %vm838
          %s840 = sld [smem:[#allocation3 + %s834]]
          %s841 = sadd.s32 %s493, 5
          %s842 = sld [smem:[#allocation3 + %s841]]
          %v843 = vstv %s840
          %vm844 = vcmp.ge.s32.totalorder %v826, %v843
          %vm845 = vcmp.ge.s32.totalorder %v827, %v843
          %vm846 = vcmp.ge.s32.totalorder %v828, %v843
          %vm847 = vcmp.ge.s32.totalorder %v829, %v843
          %v848 = vstv %s842
          %vm849 = vcmp.lt.s32.totalorder %v826, %v848
          %vm850 = vcmp.lt.s32.totalorder %v827, %v848
          %vm851 = vcmp.lt.s32.totalorder %v828, %v848
          %vm852 = vcmp.lt.s32.totalorder %v829, %v848
          %vm853 = vmand %vm844, %vm849
          %vm854 = vmand %vm845, %vm850
          %vm855 = vmand %vm846, %vm851
          %vm856 = vmand %vm847, %vm852
          %v857 = vsel %vm839, 1, 0
          %vm858 = vcmp.eq.s32.totalorder %v857, 1
          %v859 = vsel %vm853, 1, 0
          %v860 = vsel %vm854, 1, 0
          %v861 = vsel %vm855, 1, 0
          %v862 = vsel %vm856, 1, 0
          %vm863 = vcmp.eq.s32.totalorder %v859, 1
          %vm864 = vcmp.eq.s32.totalorder %v860, 1
          %vm865 = vcmp.eq.s32.totalorder %v861, 1
          %vm866 = vcmp.eq.s32.totalorder %v862, 1
          %vm867 = vmor %vm858, %vm863
          %vm868 = vmor %vm858, %vm864
          %vm869 = vmor %vm858, %vm865
          %vm870 = vmor %vm858, %vm866
          %v871 = vstv %s817
          %v872 = vsel %vm867, %v871, %v813
          %v873 = vsel %vm868, %v871, %v814
          %v874 = vsel %vm869, %v871, %v815
          %v875 = vsel %vm870, %v871, %v816
          %876 = vst [vmem:[%s440] sm:$0xff] %v872
          %877 = vst [vmem:[%s440 + $0x8] sm:$0xff] %v873
          %878 = vst [vmem:[%s440 + $0x10] sm:$0xff] %v874
          %879 = vst [vmem:[%s440 + $0x18] sm:$0xff] %v875
        $region64: #{tpu_custom_call.1} parent=43 // pred_fallthru
          _
        %s880 = sand.u32 %s228, 1
        %s881 = scalar_lea.sflag [#allocation6], %s880
        %s882 = sand.u32 %s228, 1
        %s883 = smul.addr %s882, 32
        %s884 = scalar_lea.vmem [#allocation9], %s883
        // Predicated region
        $region65: #{tpu_custom_call.1} parent=43 // pred_check
          %p885 = pneg %p238
        $region66: #{tpu_custom_call.1} parent=43 // pred_check_branch
          %887 = sbr.rel (%p885) target = $region68
        $region67: #{tpu_custom_call.1} parent=43 // pred_region
          %s888 = smul.u32 4, %s38
          %890 = vsyncadd %s881, 0
          %s891 = smul.addr %s37, 4
          %s892 = sadd.s32 %s888, %s891
          %s893 = smul.addr %s892, 8
          %s894 = scalar_lea.hbm %s7, %s893
          %s895 = sshll.u32 %s884, 4
          %s896 = int_to_ptr.vmem [resolvable:$true] %s895
          %s897 = sshll.u32 %s894, 4
          %s898 = int_to_ptr.hbm [resolvable:$true] %s897
          %903 = dma.vmem_to_hbm [thread:$0]  %s896, 512, %s898, %s881, 128, 128, 8
        $region68: #{tpu_custom_call.1} parent=43 // pred_fallthru
          _
      $region44: #{tpu_custom_call.1} parent=5 // pred_fallthru
        _
      %p904 = scmp.le.s32.totalorder 2, %s28
      // Predicated region
      $region69: #{tpu_custom_call.1} parent=5 // pred_check
        %p905 = pneg %p904
      $region70: #{tpu_custom_call.1} parent=5 // pred_check_branch
        %907 = sbr.rel (%p905) target = $region72
      $region71: #{tpu_custom_call.1} parent=5 // pred_region
        %s908 = ssub.s32 %s28, 2
        // Predicated region
        $region73: #{tpu_custom_call.1} parent=71 // pred_check
          %p909 = pneg %p244
        $region74: #{tpu_custom_call.1} parent=71 // pred_check_branch
          %911 = sbr.rel (%p909) target = $region76
        $region75: #{tpu_custom_call.1} parent=71 // pred_region
          %s912 = sand.u32 %s229, 1
          %s913 = scalar_lea.sflag [#allocation6], %s912
          %s914 = sand.u32 %s229, 1
          %s915 = smul.addr %s914, 32
          %s916 = scalar_lea.vmem [#allocation9], %s915
          %918 = dma.done %s913, 512
        $region76: #{tpu_custom_call.1} parent=71 // pred_fallthru
          _
      $region72: #{tpu_custom_call.1} parent=5 // pred_fallthru
        _
    $region6: #{tpu_custom_call.1} parent=1 // loop_footer
      %s32 = sadd.s32 1, %s28
    $region7: #{tpu_custom_call.1} parent=1 // loop_footer_branch
      %27 = sbr.rel target = $region3
    $region8: #{tpu_custom_call.1} parent=1 // loop_exit
      _
    %919 = vsyncpa [#allocation5], 1
    %s920 = scalar_lea.sflag [#allocation5], 1
    %921 = vsyncpa %s920, 1
    %922 = vsyncpa [#allocation6], 1
    %s923 = scalar_lea.sflag [#allocation6], 1
    %924 = vsyncpa %s923, 1
    %925 = vsyncpa [#allocation7], 1
    %s926 = scalar_lea.sflag [#allocation7], 1
    %927 = vsyncpa %s926, 1

</llo_original>
